<compile_context>
chip_gen: v6e
topology: v6e:2x2x1
jax: 0.10.0
libtpu: 0.0.40
codegen_flags: <defaults>
</compile_context>

<pallas_src>
import functools

import jax
import jax.numpy as jnp
from jax.experimental import pallas as pl
from jax.experimental.pallas import tpu as pltpu


_VMEM_LIMIT_BYTES = 32 * 1024 * 1024    # explicit scoped-VMEM limit (safe on v5e/v6e/v7x)
_VMEM_BUDGET_BYTES = 24 * 1024 * 1024   # what the tiling plan may consume (headroom vs limit)
_MAX_T_HW = 2048                        # cap on HW tile (bounds per-step unrolled chunk adds)


# ----------------------------------------------------------------------------
# Tiling helpers
# ----------------------------------------------------------------------------
def _pick_tn(n):
    """Batch tile: multiple of 8 (or full N).  For N >= 16 force >= 2 batch
    tiles so the 'parallel' axis shards across both v7x TensorCores."""
    if n % 8 != 0:
        return n                          # full-extent block (legal)
    if n < 16:
        return n                          # n == 8 -> single tile
    cap = max(8, min(128, (n // 2) // 8 * 8))
    tn = 8
    for d in range(8, cap + 1, 8):
        if n % d == 0:
            tn = d
    return tn


def _pick_t_hw(hw_pad, tn, c1, c2, x_itemsize, w_itemsize):
    """Largest multiple of 128 dividing hw_pad such that
       2 * x-tile + w + b + lane-acc scratch + 2 * out-tile  <=  budget."""
    fixed = (c1 * c2 * w_itemsize          # weight (single-buffered)
             + c2 * w_itemsize             # bias
             + tn * c1 * 128 * 4           # lane-shaped f32 accumulator scratch
             + 2 * tn * c2 * 4)            # double-buffered output tile
    per_buf = max(0, _VMEM_BUDGET_BYTES - fixed) // 2
    max_elems = per_buf // max(1, tn * c1 * x_itemsize)
    t = min(hw_pad, _MAX_T_HW, max(128, (max_elems // 128) * 128))
    t = max(128, (t // 128) * 128)
    while hw_pad % t != 0:
        t -= 128
    return t


def _const_spec(shape, index_map):
    """Grid-constant block (weight/bias): single-buffer it to save VMEM."""
    try:
        return pl.BlockSpec(shape, index_map, pipeline_mode=pl.Buffered(1))
    except Exception:                      # older jax without pipeline_mode
        return pl.BlockSpec(shape, index_map)


# ----------------------------------------------------------------------------
# Fused global-average-pool + 1x1 conv (+bias)  ==  Classify forward
# ----------------------------------------------------------------------------
def _classify_fused_kernel(x_ref, w_ref, b_ref, o_ref, acc_ref, *, inv_hw, t_hw):
    # x_ref:   (TN, C1, T_HW)      input tile (C1 on sublanes, H*W on lanes)
    # w_ref:   (C1, C2)            1x1 conv weight in matmul layout
    # b_ref:   (1, C2)             conv bias
    # o_ref:   (TN, C2)            output logits tile
    # acc_ref: (TN, C1, 128) f32   lane-shaped pooled-sum accumulator
    hw = pl.program_id(1)

    @pl.when(hw == 0)
    def _():
        acc_ref[...] = jnp.zeros_like(acc_ref)

    # Deferred cross-lane reduction: per step only VPU adds of 128-lane chunks
    # (chunk slices are lane-tile aligned; no XLU / relayout in steady state).
    n_chunks = t_hw // 128
    partial = x_ref[:, :, 0:128].astype(jnp.float32)
    for c in range(1, n_chunks):
        partial = partial + x_ref[:, :, c * 128:(c + 1) * 128].astype(jnp.float32)
    acc_ref[...] += partial

    @pl.when(hw == pl.num_programs(1) - 1)
    def _():
        # single lane reduce + mean, then 1x1 conv == matmul on the MXU
        pooled = jnp.sum(acc_ref[...], axis=-1) * inv_hw              # (TN, C1)
        out = jnp.dot(pooled, w_ref[...], preferred_element_type=jnp.float32)
        o_ref[...] = (out + b_ref[...]).astype(o_ref.dtype)


def _classify_fused_call(x3, w, b2, *, tn, t_hw, inv_hw, single_buffer_weights):
    n, c1, hw_pad = x3.shape
    c2 = w.shape[1]
    n_n, n_hw = n // tn, hw_pad // t_hw

    if single_buffer_weights:
        w_spec = _const_spec((c1, c2), lambda i, h: (0, 0))
        b_spec = _const_spec((1, c2), lambda i, h: (0, 0))
    else:
        w_spec = pl.BlockSpec((c1, c2), lambda i, h: (0, 0))
        b_spec = pl.BlockSpec((1, c2), lambda i, h: (0, 0))

    cost = pl.CostEstimate(
        flops=int(n * c1 * hw_pad + 2 * n * c1 * c2),
        transcendentals=0,
        bytes_accessed=int(n * c1 * hw_pad * x3.dtype.itemsize
                           + c1 * c2 * w.dtype.itemsize
                           + c2 * w.dtype.itemsize
                           + n * c2 * 4),
    )

    kernel = functools.partial(_classify_fused_kernel, inv_hw=inv_hw, t_hw=t_hw)
    return pl.pallas_call(
        kernel,
        out_shape=jax.ShapeDtypeStruct((n, c2), jnp.float32),
        grid=(n_n, n_hw),
        in_specs=[
            pl.BlockSpec((tn, c1, t_hw), lambda i, h: (i, 0, h)),
            w_spec,
            b_spec,
        ],
        out_specs=pl.BlockSpec((tn, c2), lambda i, h: (i, 0)),
        scratch_shapes=[pltpu.VMEM((tn, c1, 128), jnp.float32)],
        compiler_params=pltpu.CompilerParams(
            dimension_semantics=("parallel", "arbitrary"),
            vmem_limit_bytes=_VMEM_LIMIT_BYTES),
        cost_estimate=cost,
    )(x3, w, b2)


def classify_fused(x_nchw, w, b):
    """x_nchw: (N, C1, H, W);  w: (C1, C2);  b: (C2,)  ->  (N, C2) f32."""
    n, c1, h, wdim = x_nchw.shape
    c2 = w.shape[1]
    hw = h * wdim
    x3 = x_nchw.reshape(n, c1, hw)                 # free view of contiguous NCHW

    # lane-dense HW: zero-pad to a multiple of 128 (zeros don't change the sum;
    # the mean uses the true HW), keeping every tile pipelined / double-buffered
    hw_pad = ((hw + 127) // 128) * 128
    if hw_pad != hw:
        x3 = jnp.pad(x3, ((0, 0), (0, 0), (0, hw_pad - hw)))

    tn = _pick_tn(n)
    t_hw = _pick_t_hw(hw_pad, tn, c1, c2, x3.dtype.itemsize, w.dtype.itemsize)
    b2 = b.reshape(1, c2)
    inv_hw = 1.0 / float(hw)

    try:
        return _classify_fused_call(x3, w, b2, tn=tn, t_hw=t_hw, inv_hw=inv_hw,
                                    single_buffer_weights=True)
    except Exception:
        # fall back to default double-buffered weight specs (older jax)
        return _classify_fused_call(x3, w, b2, tn=tn, t_hw=t_hw, inv_hw=inv_hw,
                                    single_buffer_weights=False)


# ----------------------------------------------------------------------------
# Classify wrapper (matches the PyTorch forward, including list inputs)
# ----------------------------------------------------------------------------
def classify(x, params):
    w, b = params["w"], params["b"]
    if isinstance(x, (list, tuple)):
        # cat of pooled maps then conv == sum of per-tensor partial matmuls
        # against the matching weight slice; bias is added exactly once.
        out = None
        off = 0
        zero_b = jnp.zeros_like(b)
        for i, xi in enumerate(x):
            ci = xi.shape[1]
            bi = b if i == 0 else zero_b
            part = classify_fused(xi, w[off:off + ci], bi)
            out = part if out is None else out + part
            off += ci
        return out
    return classify_fused(x, w, b)


def init_params(key, c1, c2):
    kw, kb = jax.random.split(key)
    # PyTorch Conv2d weight (c2, c1, 1, 1)  ->  matmul layout (c1, c2)
    w = jax.random.normal(kw, (c1, c2), jnp.float32) * 0.1
    b = jax.random.normal(kb, (c2,), jnp.float32) * 0.1
    return {"w": w, "b": b}


if __name__ == "__main__":
    key = jax.random.PRNGKey(0)
    kx, kp, kx2 = jax.random.split(key, 3)

    N, C1, H, W = 2, 4, 16, 16
    C2 = 8
    x = jax.random.normal(kx, (N, C1, H, W), jnp.float32)
    params = init_params(kp, C1, C2)

    # fused single-tensor path (HW = 256, lane-dense)
    out = jax.block_until_ready(classify(x, params))
    assert out.shape == (N, C2), out.shape
    ref = jnp.mean(x, axis=(2, 3)) @ params["w"] + params["b"][None, :]
    assert jnp.allclose(out, ref, atol=1e-4, rtol=1e-4), \
        float(jnp.max(jnp.abs(out - ref)))

    # HW not a multiple of 128 (7x7 = 49) exercises the zero-pad path
    x7 = jax.random.normal(kx2, (N, C1, 7, 7), jnp.float32)
    out7 = jax.block_until_ready(classify(x7, params))
    ref7 = jnp.mean(x7, axis=(2, 3)) @ params["w"] + params["b"][None, :]
    assert jnp.allclose(out7, ref7, atol=1e-4, rtol=1e-4), \
        float(jnp.max(jnp.abs(out7 - ref7)))

    # list-input path: cat of pooled halves == pooling the whole tensor
    out_list = jax.block_until_ready(
        classify([x[:, : C1 // 2], x[:, C1 // 2:]], params))
    assert out_list.shape == (N, C2), out_list.shape
    assert jnp.allclose(out_list, ref, atol=1e-4, rtol=1e-4), \
        float(jnp.max(jnp.abs(out_list - ref)))

    print("KERNEL_OK")
</pallas_src>

<mosaic_0001>
module attributes {stable_mosaic.version = 11 : i64} {
  func.func @_classify_fused_kernel(%arg0: i32, %arg1: i32, %arg2: memref<2x4x256xf32, #tpu.memory_space<vmem>>, %arg3: memref<4x8xf32, #tpu.memory_space<vmem>>, %arg4: memref<1x8xf32, #tpu.memory_space<vmem>>, %arg5: memref<2x8xf32, #tpu.memory_space<vmem>>, %arg6: memref<2x4x128xf32, #tpu.memory_space<vmem>>) attributes {dimension_semantics = [#tpu.dimension_semantics<parallel>, #tpu.dimension_semantics<arbitrary>], iteration_bounds = array<i64: 1, 1>, scalar_prefetch = 0 : i64, scratch_operands = 1 : i64, tpu.core_type = #tpu.core_type<tc>, window_params = [{transform_indices = @transform_0, window_bounds = array<i64: 2, 4, 256>}, {pipeline_mode = #tpu.pipeline_mode<synchronous>, transform_indices = @transform_1, window_bounds = array<i64: 4, 8>}, {pipeline_mode = #tpu.pipeline_mode<synchronous>, transform_indices = @transform_2, window_bounds = array<i64: 1, 8>}, {transform_indices = @transform_3, window_bounds = array<i64: 2, 8>}]} {
    %c0_i32 = arith.constant 0 : i32
    %0 = arith.cmpi eq, %arg1, %c0_i32 : i32
    %1 = arith.extui %0 : i1 to i32
    %c0_i32_0 = arith.constant 0 : i32
    %2 = arith.cmpi ne, %1, %c0_i32_0 : i32
    scf.if %2 {
      %cst = arith.constant 0.000000e+00 : f32
      %12 = vector.broadcast %cst : f32 to vector<2x4x128xf32>
      %c0_13 = arith.constant 0 : index
      %c0_14 = arith.constant 0 : index
      %c0_15 = arith.constant 0 : index
      %13 = vector.load %arg6[%c0_13, %c0_14, %c0_15] : memref<2x4x128xf32, #tpu.memory_space<vmem>>, vector<2x4x128xf32>
      tpu.vector_store %arg6[%c0_13, %c0_14, %c0_15], %12 {strides = array<i32>} : memref<2x4x128xf32, #tpu.memory_space<vmem>>, vector<2x4x128xf32>,
    } else {
    }
    %c0 = arith.constant 0 : index
    %c0_1 = arith.constant 0 : index
    %c0_2 = arith.constant 0 : index
    %3 = vector.load %arg2[%c0, %c0_1, %c0_2] : memref<2x4x256xf32, #tpu.memory_space<vmem>>, vector<2x4x128xf32>
    %c0_3 = arith.constant 0 : index
    %c0_4 = arith.constant 0 : index
    %c128 = arith.constant 128 : index
    %4 = vector.load %arg2[%c0_3, %c0_4, %c128] : memref<2x4x256xf32, #tpu.memory_space<vmem>>, vector<2x4x128xf32>
    %5 = arith.addf %3, %4 : vector<2x4x128xf32>
    %c0_5 = arith.constant 0 : index
    %c0_6 = arith.constant 0 : index
    %c0_7 = arith.constant 0 : index
    %6 = vector.load %arg6[%c0_5, %c0_6, %c0_7] : memref<2x4x128xf32, #tpu.memory_space<vmem>>, vector<2x4x128xf32>
    %7 = arith.addf %6, %5 : vector<2x4x128xf32>
    %c0_8 = arith.constant 0 : index
    %c0_9 = arith.constant 0 : index
    %c0_10 = arith.constant 0 : index
    %8 = vector.load %arg6[%c0_8, %c0_9, %c0_10] : memref<2x4x128xf32, #tpu.memory_space<vmem>>, vector<2x4x128xf32>
    tpu.vector_store %arg6[%c0_8, %c0_9, %c0_10], %7 {strides = array<i32>} : memref<2x4x128xf32, #tpu.memory_space<vmem>>, vector<2x4x128xf32>,
    %c0_i32_11 = arith.constant 0 : i32
    %9 = arith.cmpi eq, %arg1, %c0_i32_11 : i32
    %10 = arith.extui %9 : i1 to i32
    %c0_i32_12 = arith.constant 0 : i32
    %11 = arith.cmpi ne, %10, %c0_i32_12 : i32
    scf.if %11 {
      %c0_13 = arith.constant 0 : index
      %c0_14 = arith.constant 0 : index
      %c0_15 = arith.constant 0 : index
      %12 = vector.load %arg6[%c0_13, %c0_14, %c0_15] : memref<2x4x128xf32, #tpu.memory_space<vmem>>, vector<2x4x128xf32>
      %cst = arith.constant dense<0.000000e+00> : vector<2x4xf32>
      %13 = vector.multi_reduction <add>, %12, %cst [2] : vector<2x4x128xf32> to vector<2x4xf32>
      %cst_16 = arith.constant 3.906250e-03 : f32
      %14 = vector.broadcast %cst_16 : f32 to vector<2x4xf32>
      %15 = arith.mulf %13, %14 : vector<2x4xf32>
      %c0_17 = arith.constant 0 : index
      %c0_18 = arith.constant 0 : index
      %16 = vector.load %arg3[%c0_17, %c0_18] : memref<4x8xf32, #tpu.memory_space<vmem>>, vector<4x8xf32>
      %cst_19 = arith.constant dense<0.000000e+00> : vector<2x8xf32>
      %17 = tpu.matmul %15, %16, %cst_19 {dimension_numbers = #tpu.dot_dimension_numbers<[1], [0], [0], [1], [0, 0, 1, 1], [], []>} : vector<2x4xf32>, vector<4x8xf32>, vector<2x8xf32> -> vector<2x8xf32>
      %c0_20 = arith.constant 0 : index
      %c0_21 = arith.constant 0 : index
      %18 = vector.load %arg4[%c0_20, %c0_21] : memref<1x8xf32, #tpu.memory_space<vmem>>, vector<1x8xf32>
      %19 = vector.broadcast %18 : vector<1x8xf32> to vector<2x8xf32>
      %20 = arith.addf %17, %19 : vector<2x8xf32>
      %c0_22 = arith.constant 0 : index
      %c0_23 = arith.constant 0 : index
      %21 = vector.load %arg5[%c0_22, %c0_23] : memref<2x8xf32, #tpu.memory_space<vmem>>, vector<2x8xf32>
      tpu.vector_store %arg5[%c0_22, %c0_23], %20 {strides = array<i32>} : memref<2x8xf32, #tpu.memory_space<vmem>>, vector<2x8xf32>,
    } else {
    }
    return
  }
  func.func @transform_0(%arg0: i32, %arg1: i32) -> (i32, i32, i32) {
    %c0_i32 = arith.constant 0 : i32
    %c0_i32_0 = arith.constant 0 : i32
    return %arg0, %c0_i32, %arg1 : i32, i32, i32
  }
  func.func @transform_1(%arg0: i32, %arg1: i32) -> (i32, i32) {
    %c0_i32 = arith.constant 0 : i32
    %c0_i32_0 = arith.constant 0 : i32
    %c0_i32_1 = arith.constant 0 : i32
    return %c0_i32, %c0_i32_0 : i32, i32
  }
  func.func @transform_2(%arg0: i32, %arg1: i32) -> (i32, i32) {
    %c0_i32 = arith.constant 0 : i32
    %c0_i32_0 = arith.constant 0 : i32
    %c0_i32_1 = arith.constant 0 : i32
    return %c0_i32, %c0_i32_0 : i32, i32
  }
  func.func @transform_3(%arg0: i32, %arg1: i32) -> (i32, i32) {
    %c0_i32 = arith.constant 0 : i32
    %c0_i32_0 = arith.constant 0 : i32
    return %arg0, %c0_i32 : i32, i32
  }
}

module attributes {stable_mosaic.version = 11 : i64} {
  func.func @_classify_fused_kernel(%arg0: i32, %arg1: i32, %arg2: memref<2x4x256xf32, #tpu.memory_space<vmem>>, %arg3: memref<4x8xf32, #tpu.memory_space<vmem>>, %arg4: memref<1x8xf32, #tpu.memory_space<vmem>>, %arg5: memref<2x8xf32, #tpu.memory_space<vmem>>, %arg6: memref<2x4x128xf32, #tpu.memory_space<vmem>>) attributes {dimension_semantics = [#tpu.dimension_semantics<parallel>, #tpu.dimension_semantics<arbitrary>], iteration_bounds = array<i64: 1, 1>, scalar_prefetch = 0 : i64, scratch_operands = 1 : i64, tpu.core_type = #tpu.core_type<tc>, window_params = [{transform_indices = @transform_0, window_bounds = array<i64: 2, 4, 256>}, {pipeline_mode = #tpu.pipeline_mode<synchronous>, transform_indices = @transform_1, window_bounds = array<i64: 4, 8>}, {pipeline_mode = #tpu.pipeline_mode<synchronous>, transform_indices = @transform_2, window_bounds = array<i64: 1, 8>}, {transform_indices = @transform_3, window_bounds = array<i64: 2, 8>}]} {
    %c0_i32 = arith.constant 0 : i32
    %0 = arith.cmpi eq, %arg1, %c0_i32 : i32
    %1 = arith.extui %0 : i1 to i32
    %c0_i32_0 = arith.constant 0 : i32
    %2 = arith.cmpi ne, %1, %c0_i32_0 : i32
    scf.if %2 {
      %cst = arith.constant 0.000000e+00 : f32
      %12 = vector.broadcast %cst : f32 to vector<2x4x128xf32>
      %c0_13 = arith.constant 0 : index
      %c0_14 = arith.constant 0 : index
      %c0_15 = arith.constant 0 : index
      %13 = vector.load %arg6[%c0_13, %c0_14, %c0_15] : memref<2x4x128xf32, #tpu.memory_space<vmem>>, vector<2x4x128xf32>
      tpu.vector_store %arg6[%c0_13, %c0_14, %c0_15], %12 {strides = array<i32>} : memref<2x4x128xf32, #tpu.memory_space<vmem>>, vector<2x4x128xf32>,
    } else {
    }
    %c0 = arith.constant 0 : index
    %c0_1 = arith.constant 0 : index
    %c0_2 = arith.constant 0 : index
    %3 = vector.load %arg2[%c0, %c0_1, %c0_2] : memref<2x4x256xf32, #tpu.memory_space<vmem>>, vector<2x4x128xf32>
    %c0_3 = arith.constant 0 : index
    %c0_4 = arith.constant 0 : index
    %c128 = arith.constant 128 : index
    %4 = vector.load %arg2[%c0_3, %c0_4, %c128] : memref<2x4x256xf32, #tpu.memory_space<vmem>>, vector<2x4x128xf32>
    %5 = arith.addf %3, %4 : vector<2x4x128xf32>
    %c0_5 = arith.constant 0 : index
    %c0_6 = arith.constant 0 : index
    %c0_7 = arith.constant 0 : index
    %6 = vector.load %arg6[%c0_5, %c0_6, %c0_7] : memref<2x4x128xf32, #tpu.memory_space<vmem>>, vector<2x4x128xf32>
    %7 = arith.addf %6, %5 : vector<2x4x128xf32>
    %c0_8 = arith.constant 0 : index
    %c0_9 = arith.constant 0 : index
    %c0_10 = arith.constant 0 : index
    %8 = vector.load %arg6[%c0_8, %c0_9, %c0_10] : memref<2x4x128xf32, #tpu.memory_space<vmem>>, vector<2x4x128xf32>
    tpu.vector_store %arg6[%c0_8, %c0_9, %c0_10], %7 {strides = array<i32>} : memref<2x4x128xf32, #tpu.memory_space<vmem>>, vector<2x4x128xf32>,
    %c0_i32_11 = arith.constant 0 : i32
    %9 = arith.cmpi eq, %arg1, %c0_i32_11 : i32
    %10 = arith.extui %9 : i1 to i32
    %c0_i32_12 = arith.constant 0 : i32
    %11 = arith.cmpi ne, %10, %c0_i32_12 : i32
    scf.if %11 {
      %c0_13 = arith.constant 0 : index
      %c0_14 = arith.constant 0 : index
      %c0_15 = arith.constant 0 : index
      %12 = vector.load %arg6[%c0_13, %c0_14, %c0_15] : memref<2x4x128xf32, #tpu.memory_space<vmem>>, vector<2x4x128xf32>
      %cst = arith.constant dense<0.000000e+00> : vector<2x4xf32>
      %13 = vector.multi_reduction <add>, %12, %cst [2] : vector<2x4x128xf32> to vector<2x4xf32>
      %cst_16 = arith.constant 3.906250e-03 : f32
      %14 = vector.broadcast %cst_16 : f32 to vector<2x4xf32>
      %15 = arith.mulf %13, %14 : vector<2x4xf32>
      %c0_17 = arith.constant 0 : index
      %c0_18 = arith.constant 0 : index
      %16 = vector.load %arg3[%c0_17, %c0_18] : memref<4x8xf32, #tpu.memory_space<vmem>>, vector<4x8xf32>
      %cst_19 = arith.constant dense<0.000000e+00> : vector<2x8xf32>
      %17 = tpu.matmul %15, %16, %cst_19 {dimension_numbers = #tpu.dot_dimension_numbers<[1], [0], [0], [1], [0, 0, 1, 1], [], []>} : vector<2x4xf32>, vector<4x8xf32>, vector<2x8xf32> -> vector<2x8xf32>
      %c0_20 = arith.constant 0 : index
      %c0_21 = arith.constant 0 : index
      %18 = vector.load %arg4[%c0_20, %c0_21] : memref<1x8xf32, #tpu.memory_space<vmem>>, vector<1x8xf32>
      %19 = vector.broadcast %18 : vector<1x8xf32> to vector<2x8xf32>
      %20 = arith.addf %17, %19 : vector<2x8xf32>
      %c0_22 = arith.constant 0 : index
      %c0_23 = arith.constant 0 : index
      %21 = vector.load %arg5[%c0_22, %c0_23] : memref<2x8xf32, #tpu.memory_space<vmem>>, vector<2x8xf32>
      tpu.vector_store %arg5[%c0_22, %c0_23], %20 {strides = array<i32>} : memref<2x8xf32, #tpu.memory_space<vmem>>, vector<2x8xf32>,
    } else {
    }
    return
  }
  func.func @transform_0(%arg0: i32, %arg1: i32) -> (i32, i32, i32) {
    %c0_i32 = arith.constant 0 : i32
    %c0_i32_0 = arith.constant 0 : i32
    return %arg0, %c0_i32, %arg1 : i32, i32, i32
  }
  func.func @transform_1(%arg0: i32, %arg1: i32) -> (i32, i32) {
    %c0_i32 = arith.constant 0 : i32
    %c0_i32_0 = arith.constant 0 : i32
    %c0_i32_1 = arith.constant 0 : i32
    return %c0_i32, %c0_i32_0 : i32, i32
  }
  func.func @transform_2(%arg0: i32, %arg1: i32) -> (i32, i32) {
    %c0_i32 = arith.constant 0 : i32
    %c0_i32_0 = arith.constant 0 : i32
    %c0_i32_1 = arith.constant 0 : i32
    return %c0_i32, %c0_i32_0 : i32, i32
  }
  func.func @transform_3(%arg0: i32, %arg1: i32) -> (i32, i32) {
    %c0_i32 = arith.constant 0 : i32
    %c0_i32_0 = arith.constant 0 : i32
    return %arg0, %c0_i32 : i32, i32
  }
}

</mosaic_0001>

<llo_original>
// kernel: tpu_custom_call.1
$region0: #{tpu_custom_call.1}
  #allocation0 [shape = 'u32[]', space=smem, size = 0x4, offset = 0x4, fixed_abs, tag = 'smem constant byte address 0x4 - core index']
  #allocation1 [shape = 'u32[144,128]{1,0:T(1,128)}', space=vmem, size = 0x12000, scoped, tag = 'internal scratch']
  #allocation2 [shape = 'f32[2,4,128]{2,1,0:T(4,128)}', space=vmem, size = 0x1000, scoped, tag = 'scratch operand']
  %s0 = inlined_call_operand.hbm [shape: f32[2,4,256], index: 0, kind: input, shape index: {}]
  %s1 = inlined_call_operand.hbm [shape: f32[4,8], index: 1, kind: input, shape index: {}]
  %s2 = inlined_call_operand.vmem [shape: f32[1,8], index: 2, kind: input, shape index: {}]
  %s3 = inlined_call_operand.hbm [shape: f32[2,8], index: 3, kind: output, shape index: {}]
  %s4 = sld [smem:[#allocation0]]
  $region38: #{tpu_custom_call.1} parent=0
    _
  %s6 = ssub.s32 1, %s4
  %s7 = scalar_select 0, %s6, %s4
  $region1: #{tpu_custom_call.1} parent=0
    #allocation3 [shape = 'u8[8192]{0}', space=vmem, size = 0x2000, scoped, tag = 'input window, operand 0, single buffered']
    #allocation4 [shape = 's32[1]{0}', space=sflag, size = 0x4, scoped, tag = 'scoped memory for tpu_custom_call.1']
    #allocation5 [shape = 's32[1]{0}', space=sflag, size = 0x4, scoped, tag = 'scoped memory for tpu_custom_call.1']
    #allocation6 [shape = 'u8[2048]{0}', space=vmem, size = 0x800, scoped, tag = 'input window, operand 1, single buffered']
    #allocation7 [shape = 's32[1]{0}', space=sflag, size = 0x4, scoped, tag = 'scoped memory for tpu_custom_call.1']
    #allocation8 [shape = 'u8[1024]{0}', space=vmem, size = 0x400, scoped, tag = 'output window, operand 0, single buffered']
    %8 = vsyncpa [#allocation4], 0
    %9 = vsyncpa [#allocation7], 0
    %10 = vsyncpa [#allocation5], 0
    // Predicated region
    $region2: #{tpu_custom_call.1} parent=1 // pred_check
      _
    $region3: #{tpu_custom_call.1} parent=1 // pred_check_branch
      %12 = sbr.rel (0) target = $region5
    $region4: #{tpu_custom_call.1} parent=1 // pred_region
      %s14 = ssub.s32 256, 256
      %15 = vsyncadd [#allocation4], %s14
      %s16 = sshll.u32 [#allocation3], 4
      %s17 = int_to_ptr.vmem [resolvable:$true] %s16
      %22 = dma.hbm_to_vmem [thread:$0]  %s0, 256, %s17, [#allocation4], 128, 128, 8
    $region5: #{tpu_custom_call.1} parent=1 // pred_fallthru
      _
    // Predicated region
    $region6: #{tpu_custom_call.1} parent=1 // pred_check
      _
    $region7: #{tpu_custom_call.1} parent=1 // pred_check_branch
      %24 = sbr.rel (0) target = $region9
    $region8: #{tpu_custom_call.1} parent=1 // pred_region
      %s26 = ssub.s32 64, 64
      %27 = vsyncadd [#allocation7], %s26
      %s29 = sshll.u32 [#allocation6], 4
      %s30 = int_to_ptr.vmem [resolvable:$true] %s29
      %32 = dma.hbm_to_vmem [thread:$0]  %s1, 64, %s30, [#allocation7]
    $region9: #{tpu_custom_call.1} parent=1 // pred_fallthru
      _
    // Predicated region
    $region10: #{tpu_custom_call.1} parent=1 // pred_check
      _
    $region11: #{tpu_custom_call.1} parent=1 // pred_check_branch
      %34 = sbr.rel (0) target = $region13
    $region12: #{tpu_custom_call.1} parent=1 // pred_region
      _
    $region13: #{tpu_custom_call.1} parent=1 // pred_fallthru
      _
    // Predicated region
    $region14: #{tpu_custom_call.1} parent=1 // pred_check
      _
    $region15: #{tpu_custom_call.1} parent=1 // pred_check_branch
      %36 = sbr.rel (0) target = $region17
    $region16: #{tpu_custom_call.1} parent=1 // pred_region
      %37 = dma.done [#allocation4], 256
    $region17: #{tpu_custom_call.1} parent=1 // pred_fallthru
      _
    // Predicated region
    $region18: #{tpu_custom_call.1} parent=1 // pred_check
      _
    $region19: #{tpu_custom_call.1} parent=1 // pred_check_branch
      %39 = sbr.rel (0) target = $region21
    $region20: #{tpu_custom_call.1} parent=1 // pred_region
      %40 = dma.done [#allocation7], 64
    $region21: #{tpu_custom_call.1} parent=1 // pred_fallthru
      _
    %p41 = scmp.eq.s32.totalorder 0, 0
    // Predicated region
    $region22: #{tpu_custom_call.1} parent=1 // pred_check
      %p42 = pneg %p41
    $region23: #{tpu_custom_call.1} parent=1 // pred_check_branch
      %44 = sbr.rel (%p42) target = $region25
    $region24: #{tpu_custom_call.1} parent=1 // pred_region
      %45 = vst [vmem:[#allocation2] sm:$0xf] 0.0
      %46 = vst [vmem:[#allocation2 + $0x4] sm:$0xf] 0.0
    $region25: #{tpu_custom_call.1} parent=1 // pred_fallthru
      _
    %v47 = vld [vmem:[#allocation3] sm:$0xf]
    %v48 = vld [vmem:[#allocation3 + $0x8] sm:$0xf]
    %v49 = vld [vmem:[#allocation3 + $0x4] sm:$0xf]
    %v50 = vld [vmem:[#allocation3 + $0xc] sm:$0xf]
    %v51 = vadd.f32 %v47, %v49
    %v52 = vadd.f32 %v48, %v50
    %v53 = vld [vmem:[#allocation2] sm:$0xf]
    %v54 = vld [vmem:[#allocation2 + $0x4] sm:$0xf]
    %v55 = vadd.f32 %v53, %v51
    %v56 = vadd.f32 %v54, %v52
    %57 = vst [vmem:[#allocation2] sm:$0xf] %v55
    %58 = vst [vmem:[#allocation2 + $0x4] sm:$0xf] %v56
    // Predicated region
    $region26: #{tpu_custom_call.1} parent=1 // pred_check
      %p59 = pneg %p41
    $region27: #{tpu_custom_call.1} parent=1 // pred_check_branch
      %61 = sbr.rel (%p59) target = $region29
    $region28: #{tpu_custom_call.1} parent=1 // pred_region
      %v62 = vld [vmem:[#allocation2] sm:$0xf]
      %v63 = vld [vmem:[#allocation2 + $0x4] sm:$0xf]
      %vm64 = vcmask 1043456
      %v65 = vsel %vm64, %v62, 0.0
      %66 = vadd.xlane.f32.xlu0 %v65
      %v67 = vpop.xlane.xlu0 %66
      %v68 = vsel %vm64, %v63, 0.0
      %69 = vadd.xlane.f32.xlu0 %v68
      %v70 = vpop.xlane.xlu0 %69
      %v71 = vmul.f32 %v67, 0.00390625
      %v72 = vmul.f32 %v70, 0.00390625
      %v73 = vld [vmem:[#allocation6] sm:$0xf]
      %v74 = vld [vmem:[%s2] sm:$0x1]
      %v76 = vlaneseq
      %v77 = vshrl.u32 %v76, 7
      %v78 = vsub.s32 0, %v77
      %v79 = vrot.slane %v74, %v78
      %v83 = vlaneseq
      %v84 = vand.u32 %v83, 127
      %v85 = vlaneseq
      %v86 = vshrl.u32 %v85, 7
      %v87 = vsub.s32 %v84, %v86
      %v88 = vrot.slane %v71, %v87
      %v89 = vlaneseq
      %v90 = vshrl.u32 %v89, 7
      %v91 = vsub.s32 %v84, %v90
      %v92 = vrot.slane %v72, %v91
      %vm93 = vcmask 1041409
      %v94 = vsel %vm93, %v92, %v88
      %vm95 = vcmask 31744
      %v96 = vsel %vm95, %v94, 0
      %v99 = vsel %vm64, %v73, 0
      %101 = vmatprep.subr.mxu0 0.0
      %102 = vmatpush1.msra.mxu0 0.0
      %103 = vmatprep.subr.mxu0 0.0
      %104 = vmatpush1.msra.mxu0 0.0
      %105 = vmatprep.subr.mxu0 0.0
      %106 = vmatpush1.msra.mxu0 0.0
      %107 = vmatprep.subr.mxu0 0.0
      %108 = vmatpush1.msra.mxu0 0.0
      %109 = vmatprep.subr.mxu0 0.0
      %110 = vmatpush1.msra.mxu0 0.0
      %111 = vmatprep.subr.mxu0 0.0
      %112 = vmatpush1.msra.mxu0 0.0
      %113 = vmatprep.subr.mxu0 0.0
      %114 = vmatpush1.msra.mxu0 0.0
      %115 = vmatprep.subr.mxu0 0.0
      %116 = vmatpush1.msra.mxu0 0.0
      %117 = vmatprep.subr.mxu0 0.0
      %118 = vmatpush1.msra.mxu0 0.0
      %119 = vmatprep.subr.mxu0 0.0
      %120 = vmatpush1.msra.mxu0 0.0
      %121 = vmatprep.subr.mxu0 0.0
      %122 = vmatpush1.msra.mxu0 0.0
      %123 = vmatprep.subr.mxu0 0.0
      %124 = vmatpush1.msra.mxu0 0.0
      %125 = vmatprep.subr.mxu0 0.0
      %126 = vmatpush1.msra.mxu0 0.0
      %127 = vmatprep.subr.mxu0 0.0
      %128 = vmatpush1.msra.mxu0 0.0
      %129 = vmatprep.subr.mxu0 0.0
      %130 = vmatpush1.msra.mxu0 0.0
      %131 = vmatprep.subr.mxu0 0.0
      %132 = vmatpush1.msra.mxu0 %v99
      %133 = vmatprep.subr.mxu0 0.0
      %134 = vmatpush2.msra.mxu0 0.0
      %135 = vmatprep.subr.mxu0 0.0
      %136 = vmatpush2.msra.mxu0 0.0
      %137 = vmatprep.subr.mxu0 0.0
      %138 = vmatpush2.msra.mxu0 0.0
      %139 = vmatprep.subr.mxu0 0.0
      %140 = vmatpush2.msra.mxu0 0.0
      %141 = vmatprep.subr.mxu0 0.0
      %142 = vmatpush2.msra.mxu0 0.0
      %143 = vmatprep.subr.mxu0 0.0
      %144 = vmatpush2.msra.mxu0 0.0
      %145 = vmatprep.subr.mxu0 0.0
      %146 = vmatpush2.msra.mxu0 0.0
      %147 = vmatprep.subr.mxu0 0.0
      %148 = vmatpush2.msra.mxu0 0.0
      %149 = vmatprep.subr.mxu0 0.0
      %150 = vmatpush2.msra.mxu0 0.0
      %151 = vmatprep.subr.mxu0 0.0
      %152 = vmatpush2.msra.mxu0 0.0
      %153 = vmatprep.subr.mxu0 0.0
      %154 = vmatpush2.msra.mxu0 0.0
      %155 = vmatprep.subr.mxu0 0.0
      %156 = vmatpush2.msra.mxu0 0.0
      %157 = vmatprep.subr.mxu0 0.0
      %158 = vmatpush2.msra.mxu0 0.0
      %159 = vmatprep.subr.mxu0 0.0
      %160 = vmatpush2.msra.mxu0 0.0
      %161 = vmatprep.subr.mxu0 0.0
      %162 = vmatpush2.msra.mxu0 0.0
      %163 = vmatprep.subr.mxu0 0.0
      %164 = vmatpush2.msra.mxu0 0.0
      %165 = vmatprep.mubr.f32.mxu0 0.0
      %166 = vmatmul.mubr.f32.gmra.mxu0 %v96
      %v167 = vpop.f32.mrf.mxu0
      %v168 = vadd.f32 %v79, %v167
      %v169 = vpop.f32.mrf.mxu0
      %170 = vdwg.mxu0
      %vm171 = vcmask 58368
      %172 = vst.msk [vmem:[#allocation8] sm:$0x3] %vm171, %v168
    $region29: #{tpu_custom_call.1} parent=1 // pred_fallthru
      _
    // Predicated region
    $region30: #{tpu_custom_call.1} parent=1 // pred_check
      _
    $region31: #{tpu_custom_call.1} parent=1 // pred_check_branch
      %174 = sbr.rel (0) target = $region33
    $region32: #{tpu_custom_call.1} parent=1 // pred_region
      %s176 = ssub.s32 32, 32
      %177 = vsyncadd [#allocation5], %s176
      %s179 = sshll.u32 [#allocation8], 4
      %s180 = int_to_ptr.vmem [resolvable:$true] %s179
      %182 = dma.vmem_to_hbm [thread:$0]  %s180, 32, %s3, [#allocation5]
    $region33: #{tpu_custom_call.1} parent=1 // pred_fallthru
      _
    // Predicated region
    $region34: #{tpu_custom_call.1} parent=1 // pred_check
      _
    $region35: #{tpu_custom_call.1} parent=1 // pred_check_branch
      %184 = sbr.rel (0) target = $region37
    $region36: #{tpu_custom_call.1} parent=1 // pred_region
      %185 = dma.done [#allocation5], 32
    $region37: #{tpu_custom_call.1} parent=1 // pred_fallthru
      _
    %186 = vsyncpa [#allocation4], 1
    %187 = vsyncpa [#allocation7], 1
    %188 = vsyncpa [#allocation5], 1

// kernel: tpu_custom_call.1
$region0: #{tpu_custom_call.1}
  #allocation0 [shape = 'u32[]', space=smem, size = 0x4, offset = 0x4, fixed_abs, tag = 'smem constant byte address 0x4 - core index']
  #allocation1 [shape = 'u32[144,128]{1,0:T(1,128)}', space=vmem, size = 0x12000, scoped, tag = 'internal scratch']
  #allocation2 [shape = 'f32[2,4,128]{2,1,0:T(4,128)}', space=vmem, size = 0x1000, scoped, tag = 'scratch operand']
  %s0 = inlined_call_operand.hbm [shape: f32[2,4,256], index: 0, kind: input, shape index: {}]
  %s1 = inlined_call_operand.hbm [shape: f32[4,8], index: 1, kind: input, shape index: {}]
  %s2 = inlined_call_operand.vmem [shape: f32[1,8], index: 2, kind: input, shape index: {}]
  %s3 = inlined_call_operand.hbm [shape: f32[2,8], index: 3, kind: output, shape index: {}]
  %s4 = sld [smem:[#allocation0]]
  $region38: #{tpu_custom_call.1} parent=0
    _
  %s6 = ssub.s32 1, %s4
  %s7 = scalar_select 0, %s6, %s4
  $region1: #{tpu_custom_call.1} parent=0
    #allocation3 [shape = 'u8[8192]{0}', space=vmem, size = 0x2000, scoped, tag = 'input window, operand 0, single buffered']
    #allocation4 [shape = 's32[1]{0}', space=sflag, size = 0x4, scoped, tag = 'scoped memory for tpu_custom_call.1']
    #allocation5 [shape = 's32[1]{0}', space=sflag, size = 0x4, scoped, tag = 'scoped memory for tpu_custom_call.1']
    #allocation6 [shape = 'u8[2048]{0}', space=vmem, size = 0x800, scoped, tag = 'input window, operand 1, single buffered']
    #allocation7 [shape = 's32[1]{0}', space=sflag, size = 0x4, scoped, tag = 'scoped memory for tpu_custom_call.1']
    #allocation8 [shape = 'u8[1024]{0}', space=vmem, size = 0x400, scoped, tag = 'output window, operand 0, single buffered']
    %8 = vsyncpa [#allocation4], 0
    %9 = vsyncpa [#allocation7], 0
    %10 = vsyncpa [#allocation5], 0
    // Predicated region
    $region2: #{tpu_custom_call.1} parent=1 // pred_check
      _
    $region3: #{tpu_custom_call.1} parent=1 // pred_check_branch
      %12 = sbr.rel (0) target = $region5
    $region4: #{tpu_custom_call.1} parent=1 // pred_region
      %s14 = ssub.s32 256, 256
      %15 = vsyncadd [#allocation4], %s14
      %s16 = sshll.u32 [#allocation3], 4
      %s17 = int_to_ptr.vmem [resolvable:$true] %s16
      %22 = dma.hbm_to_vmem [thread:$0]  %s0, 256, %s17, [#allocation4], 128, 128, 8
    $region5: #{tpu_custom_call.1} parent=1 // pred_fallthru
      _
    // Predicated region
    $region6: #{tpu_custom_call.1} parent=1 // pred_check
      _
    $region7: #{tpu_custom_call.1} parent=1 // pred_check_branch
      %24 = sbr.rel (0) target = $region9
    $region8: #{tpu_custom_call.1} parent=1 // pred_region
      %s26 = ssub.s32 64, 64
      %27 = vsyncadd [#allocation7], %s26
      %s29 = sshll.u32 [#allocation6], 4
      %s30 = int_to_ptr.vmem [resolvable:$true] %s29
      %32 = dma.hbm_to_vmem [thread:$0]  %s1, 64, %s30, [#allocation7]
    $region9: #{tpu_custom_call.1} parent=1 // pred_fallthru
      _
    // Predicated region
    $region10: #{tpu_custom_call.1} parent=1 // pred_check
      _
    $region11: #{tpu_custom_call.1} parent=1 // pred_check_branch
      %34 = sbr.rel (0) target = $region13
    $region12: #{tpu_custom_call.1} parent=1 // pred_region
      _
    $region13: #{tpu_custom_call.1} parent=1 // pred_fallthru
      _
    // Predicated region
    $region14: #{tpu_custom_call.1} parent=1 // pred_check
      _
    $region15: #{tpu_custom_call.1} parent=1 // pred_check_branch
      %36 = sbr.rel (0) target = $region17
    $region16: #{tpu_custom_call.1} parent=1 // pred_region
      %37 = dma.done [#allocation4], 256
    $region17: #{tpu_custom_call.1} parent=1 // pred_fallthru
      _
    // Predicated region
    $region18: #{tpu_custom_call.1} parent=1 // pred_check
      _
    $region19: #{tpu_custom_call.1} parent=1 // pred_check_branch
      %39 = sbr.rel (0) target = $region21
    $region20: #{tpu_custom_call.1} parent=1 // pred_region
      %40 = dma.done [#allocation7], 64
    $region21: #{tpu_custom_call.1} parent=1 // pred_fallthru
      _
    %p41 = scmp.eq.s32.totalorder 0, 0
    // Predicated region
    $region22: #{tpu_custom_call.1} parent=1 // pred_check
      %p42 = pneg %p41
    $region23: #{tpu_custom_call.1} parent=1 // pred_check_branch
      %44 = sbr.rel (%p42) target = $region25
    $region24: #{tpu_custom_call.1} parent=1 // pred_region
      %45 = vst [vmem:[#allocation2] sm:$0xf] 0.0
      %46 = vst [vmem:[#allocation2 + $0x4] sm:$0xf] 0.0
    $region25: #{tpu_custom_call.1} parent=1 // pred_fallthru
      _
    %v47 = vld [vmem:[#allocation3] sm:$0xf]
    %v48 = vld [vmem:[#allocation3 + $0x8] sm:$0xf]
    %v49 = vld [vmem:[#allocation3 + $0x4] sm:$0xf]
    %v50 = vld [vmem:[#allocation3 + $0xc] sm:$0xf]
    %v51 = vadd.f32 %v47, %v49
    %v52 = vadd.f32 %v48, %v50
    %v53 = vld [vmem:[#allocation2] sm:$0xf]
    %v54 = vld [vmem:[#allocation2 + $0x4] sm:$0xf]
    %v55 = vadd.f32 %v53, %v51
    %v56 = vadd.f32 %v54, %v52
    %57 = vst [vmem:[#allocation2] sm:$0xf] %v55
    %58 = vst [vmem:[#allocation2 + $0x4] sm:$0xf] %v56
    // Predicated region
    $region26: #{tpu_custom_call.1} parent=1 // pred_check
      %p59 = pneg %p41
    $region27: #{tpu_custom_call.1} parent=1 // pred_check_branch
      %61 = sbr.rel (%p59) target = $region29
    $region28: #{tpu_custom_call.1} parent=1 // pred_region
      %v62 = vld [vmem:[#allocation2] sm:$0xf]
      %v63 = vld [vmem:[#allocation2 + $0x4] sm:$0xf]
      %vm64 = vcmask 1043456
      %v65 = vsel %vm64, %v62, 0.0
      %66 = vadd.xlane.f32.xlu0 %v65
      %v67 = vpop.xlane.xlu0 %66
      %v68 = vsel %vm64, %v63, 0.0
      %69 = vadd.xlane.f32.xlu0 %v68
      %v70 = vpop.xlane.xlu0 %69
      %v71 = vmul.f32 %v67, 0.00390625
      %v72 = vmul.f32 %v70, 0.00390625
      %v73 = vld [vmem:[#allocation6] sm:$0xf]
      %v74 = vld [vmem:[%s2] sm:$0x1]
      %v76 = vlaneseq
      %v77 = vshrl.u32 %v76, 7
      %v78 = vsub.s32 0, %v77
      %v79 = vrot.slane %v74, %v78
      %v83 = vlaneseq
      %v84 = vand.u32 %v83, 127
      %v85 = vlaneseq
      %v86 = vshrl.u32 %v85, 7
      %v87 = vsub.s32 %v84, %v86
      %v88 = vrot.slane %v71, %v87
      %v89 = vlaneseq
      %v90 = vshrl.u32 %v89, 7
      %v91 = vsub.s32 %v84, %v90
      %v92 = vrot.slane %v72, %v91
      %vm93 = vcmask 1041409
      %v94 = vsel %vm93, %v92, %v88
      %vm95 = vcmask 31744
      %v96 = vsel %vm95, %v94, 0
      %v99 = vsel %vm64, %v73, 0
      %101 = vmatprep.subr.mxu0 0.0
      %102 = vmatpush1.msra.mxu0 0.0
      %103 = vmatprep.subr.mxu0 0.0
      %104 = vmatpush1.msra.mxu0 0.0
      %105 = vmatprep.subr.mxu0 0.0
      %106 = vmatpush1.msra.mxu0 0.0
      %107 = vmatprep.subr.mxu0 0.0
      %108 = vmatpush1.msra.mxu0 0.0
      %109 = vmatprep.subr.mxu0 0.0
      %110 = vmatpush1.msra.mxu0 0.0
      %111 = vmatprep.subr.mxu0 0.0
      %112 = vmatpush1.msra.mxu0 0.0
      %113 = vmatprep.subr.mxu0 0.0
      %114 = vmatpush1.msra.mxu0 0.0
      %115 = vmatprep.subr.mxu0 0.0
      %116 = vmatpush1.msra.mxu0 0.0
      %117 = vmatprep.subr.mxu0 0.0
      %118 = vmatpush1.msra.mxu0 0.0
      %119 = vmatprep.subr.mxu0 0.0
      %120 = vmatpush1.msra.mxu0 0.0
      %121 = vmatprep.subr.mxu0 0.0
      %122 = vmatpush1.msra.mxu0 0.0
      %123 = vmatprep.subr.mxu0 0.0
      %124 = vmatpush1.msra.mxu0 0.0
      %125 = vmatprep.subr.mxu0 0.0
      %126 = vmatpush1.msra.mxu0 0.0
      %127 = vmatprep.subr.mxu0 0.0
      %128 = vmatpush1.msra.mxu0 0.0
      %129 = vmatprep.subr.mxu0 0.0
      %130 = vmatpush1.msra.mxu0 0.0
      %131 = vmatprep.subr.mxu0 0.0
      %132 = vmatpush1.msra.mxu0 %v99
      %133 = vmatprep.subr.mxu0 0.0
      %134 = vmatpush2.msra.mxu0 0.0
      %135 = vmatprep.subr.mxu0 0.0
      %136 = vmatpush2.msra.mxu0 0.0
      %137 = vmatprep.subr.mxu0 0.0
      %138 = vmatpush2.msra.mxu0 0.0
      %139 = vmatprep.subr.mxu0 0.0
      %140 = vmatpush2.msra.mxu0 0.0
      %141 = vmatprep.subr.mxu0 0.0
      %142 = vmatpush2.msra.mxu0 0.0
      %143 = vmatprep.subr.mxu0 0.0
      %144 = vmatpush2.msra.mxu0 0.0
      %145 = vmatprep.subr.mxu0 0.0
      %146 = vmatpush2.msra.mxu0 0.0
      %147 = vmatprep.subr.mxu0 0.0
      %148 = vmatpush2.msra.mxu0 0.0
      %149 = vmatprep.subr.mxu0 0.0
      %150 = vmatpush2.msra.mxu0 0.0
      %151 = vmatprep.subr.mxu0 0.0
      %152 = vmatpush2.msra.mxu0 0.0
      %153 = vmatprep.subr.mxu0 0.0
      %154 = vmatpush2.msra.mxu0 0.0
      %155 = vmatprep.subr.mxu0 0.0
      %156 = vmatpush2.msra.mxu0 0.0
      %157 = vmatprep.subr.mxu0 0.0
      %158 = vmatpush2.msra.mxu0 0.0
      %159 = vmatprep.subr.mxu0 0.0
      %160 = vmatpush2.msra.mxu0 0.0
      %161 = vmatprep.subr.mxu0 0.0
      %162 = vmatpush2.msra.mxu0 0.0
      %163 = vmatprep.subr.mxu0 0.0
      %164 = vmatpush2.msra.mxu0 0.0
      %165 = vmatprep.mubr.f32.mxu0 0.0
      %166 = vmatmul.mubr.f32.gmra.mxu0 %v96
      %v167 = vpop.f32.mrf.mxu0
      %v168 = vadd.f32 %v79, %v167
      %v169 = vpop.f32.mrf.mxu0
      %170 = vdwg.mxu0
      %vm171 = vcmask 58368
      %172 = vst.msk [vmem:[#allocation8] sm:$0x3] %vm171, %v168
    $region29: #{tpu_custom_call.1} parent=1 // pred_fallthru
      _
    // Predicated region
    $region30: #{tpu_custom_call.1} parent=1 // pred_check
      _
    $region31: #{tpu_custom_call.1} parent=1 // pred_check_branch
      %174 = sbr.rel (0) target = $region33
    $region32: #{tpu_custom_call.1} parent=1 // pred_region
      %s176 = ssub.s32 32, 32
      %177 = vsyncadd [#allocation5], %s176
      %s179 = sshll.u32 [#allocation8], 4
      %s180 = int_to_ptr.vmem [resolvable:$true] %s179
      %182 = dma.vmem_to_hbm [thread:$0]  %s180, 32, %s3, [#allocation5]
    $region33: #{tpu_custom_call.1} parent=1 // pred_fallthru
      _
    // Predicated region
    $region34: #{tpu_custom_call.1} parent=1 // pred_check
      _
    $region35: #{tpu_custom_call.1} parent=1 // pred_check_branch
      %184 = sbr.rel (0) target = $region37
    $region36: #{tpu_custom_call.1} parent=1 // pred_region
      %185 = dma.done [#allocation5], 32
    $region37: #{tpu_custom_call.1} parent=1 // pred_fallthru
      _
    %186 = vsyncpa [#allocation4], 1
    %187 = vsyncpa [#allocation7], 1
    %188 = vsyncpa [#allocation5], 1

</llo_original>
